<compile_context>
chip_gen: v6e
topology: v6e:2x2x1
jax: 0.10.0
libtpu: 0.0.40
codegen_flags: <defaults>
</compile_context>

<pallas_src>
import functools

import jax
import jax.numpy as jnp
from jax.experimental import pallas as pl
from jax.experimental.pallas import tpu as pltpu


def _critic_kernel(x_ref, w1_ref, b1_ref, w2_ref, b2_ref, w3_ref, b3_ref,
                   out_ref, *, h1_dim):
    # --- Layer 1 + action passthrough, one MXU pass (bf16 x bf16, f32 acc) --
    # x = [state, action]; w1 has identity columns that copy the action into
    # lanes [h1_dim, h1_dim + A) of the padded hidden vector.
    pre = jnp.dot(x_ref[...], w1_ref[...],
                  preferred_element_type=jnp.float32) + b1_ref[...]
    # ReLU only on the real hidden lanes [0, h1_dim); the action lanes keep
    # their raw (possibly negative) values, remaining padding lanes are zero
    # either way (zero W1 cols / b1 lanes, and their W2 rows are zero too).
    lane = jax.lax.broadcasted_iota(jnp.int32, pre.shape, dimension=1)
    comb = jnp.where(lane < h1_dim, jnp.maximum(pre, 0.0), pre)
    comb = comb.astype(jnp.bfloat16)          # single bf16 copy feeds the MXU

    # --- Layer 2: Linear(400 + A, 300->384 padded) + ReLU, one MXU pass -----
    acc = jnp.dot(comb, w2_ref[...],
                  preferred_element_type=jnp.float32) + b2_ref[...]
    h2 = jnp.maximum(acc, 0.0)

    # --- Layer 3: Linear(300, 1) as lane-dense VPU multiply + lane reduce ---
    # (padded w3 lanes are zero, so the reduce over 384 lanes is exact).
    out_ref[...] = (jnp.sum(h2 * w3_ref[...], axis=-1, keepdims=True)
                    + b3_ref[...])


def prepare_params(params):
    """One-time parameter prep (hoisted out of the per-call forward).

    - transpose PyTorch [out, in] weights to [in, out]
    - fold the concat: W1 gains identity passthrough columns for the action,
      W2's action rows are placed at the matching (padded) row offsets
    - zero-pad hidden dims 400+A -> 512 and 300 -> 384 (numerically exact)
    - reshape biases to 2-D, cast the two large matrices to bf16
    """
    w1, b1 = params["w1"], params["b1"]        # [400, S], [400]
    w2, b2 = params["w2"], params["b2"]        # [300, 400+A], [300]
    w3, b3 = params["w3"], params["b3"]        # [1, 300], [1]

    H1, S = w1.shape
    H2, K2 = w2.shape
    A = K2 - H1
    SA = S + A
    H1P = ((H1 + A + 127) // 128) * 128        # 404 -> 512
    H2P = ((H2 + 127) // 128) * 128            # 300 -> 384

    # Layer-1 weight: real W1 columns + identity action-passthrough columns.
    w1x = jnp.zeros((SA, H1P), jnp.float32)
    w1x = w1x.at[:S, :H1].set(w1.T.astype(jnp.float32))
    w1x = w1x.at[S:, H1:H1 + A].set(jnp.eye(A, dtype=jnp.float32))
    w1x = w1x.astype(jnp.bfloat16)
    b1_p = jnp.zeros((1, H1P), jnp.float32).at[:, :H1].set(
        b1.astype(jnp.float32))

    # Layer-2 weight: hidden rows at [0, 400), action rows at [400, 400+A),
    # all remaining padded rows / the padded cols [300, 384) are zero -> exact.
    w2_p = jnp.zeros((H1P, H2P), jnp.float32)
    w2_p = w2_p.at[:H1 + A, :H2].set(w2.T.astype(jnp.float32))
    w2_p = w2_p.astype(jnp.bfloat16)
    b2_p = jnp.zeros((1, H2P), jnp.float32).at[:, :H2].set(
        b2.astype(jnp.float32))

    # Final layer as a lane-dense row (padded lanes zero -> exact).
    w3_p = jnp.zeros((1, H2P), jnp.float32).at[:, :H2].set(
        w3.reshape(1, H2).astype(jnp.float32))
    b3_p = b3.reshape(1, 1).astype(jnp.float32)

    return {"w1x": w1x, "b1": b1_p, "w2": w2_p, "b2": b2_p,
            "w3": w3_p, "b3": b3_p, "h1_dim": int(H1), "act_dim": int(A)}


def critic_forward(state, action, prepped, *, batch_block=512):
    """Pallas wrapper. state: [B, S], action: [B, A] -> q: [B, 1].

    batch_block: sweep 512 / 1024 for training-scale B; pick it so the grid
    length is even on v7x (2 TensorCores per chip).
    """
    B, S = state.shape
    A = action.shape[1]
    SA = S + A
    H1P = prepped["w1x"].shape[1]
    H2P = prepped["w2"].shape[1]
    assert prepped["w1x"].shape[0] == SA, "prepped params / input dim mismatch"

    # Fold the concat into the kernel input and pre-cast to bf16 once here
    # (halves activation DMA bytes; no per-step cast inside the kernel).
    x = jnp.concatenate([state, action], axis=1).astype(jnp.bfloat16)

    kernel = functools.partial(_critic_kernel, h1_dim=prepped["h1_dim"])
    weights = (prepped["w1x"], prepped["b1"], prepped["w2"], prepped["b2"],
               prepped["w3"], prepped["b3"])

    if B > batch_block:
        # Training-scale batches: pad B up to a multiple of batch_block so the
        # pipelined / megacore path always runs (no gridless VMEM cliff for
        # non-divisible B); padded rows are sliced off below.  Weights stay
        # pinned to block (0, 0) so they remain VMEM-resident across steps.
        n_blocks = pl.cdiv(B, batch_block)
        b_pad = n_blocks * batch_block
        if b_pad != B:
            x = jnp.pad(x, ((0, b_pad - B), (0, 0)))

        pinned = lambda shape: pl.BlockSpec(shape, lambda i: (0, 0))
        out = pl.pallas_call(
            kernel,
            out_shape=jax.ShapeDtypeStruct((b_pad, 1), jnp.float32),
            grid=(n_blocks,),
            in_specs=[
                pl.BlockSpec((batch_block, SA), lambda i: (i, 0)),
                pinned((SA, H1P)),
                pinned((1, H1P)),
                pinned((H1P, H2P)),
                pinned((1, H2P)),
                pinned((1, H2P)),
                pinned((1, 1)),
            ],
            out_specs=pl.BlockSpec((batch_block, 1), lambda i: (i, 0)),
            compiler_params=pltpu.CompilerParams(
                dimension_semantics=("parallel",)),
        )(x, *weights)
        return out[:B]

    # Small batch (inference scale): everything fits in VMEM, single gridless
    # invocation.
    # TODO(synk): at B~8 this is launch-overhead bound; stack several critic
    # evaluations (online + target / twin critics) behind a leading grid axis
    # over weight sets to amortize the pallas_call.
    vmem = pl.BlockSpec(memory_space=pltpu.VMEM)
    return pl.pallas_call(
        kernel,
        out_shape=jax.ShapeDtypeStruct((B, 1), jnp.float32),
        in_specs=[vmem] * 7,
        out_specs=vmem,
    )(x, *weights)


def init_params(key, state_dim, action_dim):
    """Deterministic synthetic parameters with PyTorch Linear shapes."""
    ks = jax.random.split(key, 6)

    def unif(k, shape, fan_in):
        bound = 1.0 / jnp.sqrt(fan_in)
        return jax.random.uniform(k, shape, jnp.float32, -bound, bound)

    return {
        "w1": unif(ks[0], (400, state_dim), state_dim),
        "b1": unif(ks[1], (400,), state_dim),
        "w2": unif(ks[2], (300, 400 + action_dim), 400 + action_dim),
        "b2": unif(ks[3], (300,), 400 + action_dim),
        "w3": unif(ks[4], (1, 300), 300),
        "b3": unif(ks[5], (1,), 300),
    }


def critic_reference_f32(state, action, params):
    """Pure-JAX f32 reference mirroring the PyTorch forward exactly."""
    h1 = jax.nn.relu(state @ params["w1"].T + params["b1"])
    comb = jnp.concatenate([h1, action], axis=1)
    h2 = jax.nn.relu(comb @ params["w2"].T + params["b2"])
    return h2 @ params["w3"].T + params["b3"]


def critic_reference_bf16(state, action, prepped):
    """Pure-JAX reference with the same bf16 quantization points as the kernel
    (including the folded action path through the bf16 MXU passes)."""
    x = jnp.concatenate([state, action], axis=1).astype(jnp.bfloat16)
    pre = (jnp.dot(x, prepped["w1x"], preferred_element_type=jnp.float32)
           + prepped["b1"])
    lane = jnp.arange(pre.shape[-1])[None, :]
    comb = jnp.where(lane < prepped["h1_dim"],
                     jnp.maximum(pre, 0.0), pre).astype(jnp.bfloat16)
    acc = (jnp.dot(comb, prepped["w2"], preferred_element_type=jnp.float32)
           + prepped["b2"])
    h2 = jnp.maximum(acc, 0.0)
    return jnp.sum(h2 * prepped["w3"], axis=-1, keepdims=True) + prepped["b3"]


if __name__ == "__main__":
    key = jax.random.PRNGKey(0)
    k_p, k_s, k_a, k_s2, k_a2 = jax.random.split(key, 5)

    state_dim, action_dim = 16, 4
    params = init_params(k_p, state_dim, action_dim)
    prepped = prepare_params(params)      # one-time prep, hoisted out of forward

    # ---- small (inference-scale) batch: gridless path -----------------------
    batch = 8
    state = jax.random.normal(k_s, (batch, state_dim), jnp.float32)
    action = jax.random.normal(k_a, (batch, action_dim), jnp.float32)

    q = jax.block_until_ready(critic_forward(state, action, prepped))
    assert q.shape == (batch, 1)

    q_bf16 = critic_reference_bf16(state, action, prepped)
    assert jnp.allclose(q, q_bf16, atol=2e-3, rtol=2e-3), "mismatch vs bf16 ref"
    q_f32 = critic_reference_f32(state, action, params)
    assert jnp.allclose(q, q_f32, atol=5e-2, rtol=5e-2), "mismatch vs f32 ref"

    # ---- training-scale, non-divisible batch: padded grid + "parallel" ------
    batch_big = 1000                      # pads to 1024 -> grid of 2 x 512
    state2 = jax.random.normal(k_s2, (batch_big, state_dim), jnp.float32)
    action2 = jax.random.normal(k_a2, (batch_big, action_dim), jnp.float32)

    q2 = jax.block_until_ready(critic_forward(state2, action2, prepped))
    assert q2.shape == (batch_big, 1)
    q2_bf16 = critic_reference_bf16(state2, action2, prepped)
    assert jnp.allclose(q2, q2_bf16, atol=2e-3, rtol=2e-3), "mismatch (grid)"

    print("KERNEL_OK")
</pallas_src>

<mosaic_0001>
module attributes {stable_mosaic.version = 11 : i64} {
  func.func @_critic_kernel(%arg0: memref<8x20xbf16, #tpu.memory_space<vmem>>, %arg1: memref<20x512xbf16, #tpu.memory_space<vmem>>, %arg2: memref<1x512xf32, #tpu.memory_space<vmem>>, %arg3: memref<512x384xbf16, #tpu.memory_space<vmem>>, %arg4: memref<1x384xf32, #tpu.memory_space<vmem>>, %arg5: memref<1x384xf32, #tpu.memory_space<vmem>>, %arg6: memref<1x1xf32, #tpu.memory_space<vmem>>, %arg7: memref<8x1xf32, #tpu.memory_space<vmem>>) attributes {dimension_semantics = [], scalar_prefetch = 0 : i64, scratch_operands = 0 : i64, tpu.core_type = #tpu.core_type<tc>} {
    %c0 = arith.constant 0 : index
    %c0_0 = arith.constant 0 : index
    %0 = vector.load %arg0[%c0, %c0_0] : memref<8x20xbf16, #tpu.memory_space<vmem>>, vector<8x20xbf16>
    %c0_1 = arith.constant 0 : index
    %c0_2 = arith.constant 0 : index
    %1 = vector.load %arg1[%c0_1, %c0_2] : memref<20x512xbf16, #tpu.memory_space<vmem>>, vector<20x512xbf16>
    %cst = arith.constant dense<0.000000e+00> : vector<8x512xf32>
    %2 = tpu.matmul %0, %1, %cst {dimension_numbers = #tpu.dot_dimension_numbers<[1], [0], [0], [1], [0, 0, 1, 1], [], []>} : vector<8x20xbf16>, vector<20x512xbf16>, vector<8x512xf32> -> vector<8x512xf32>
    %c0_3 = arith.constant 0 : index
    %c0_4 = arith.constant 0 : index
    %3 = vector.load %arg2[%c0_3, %c0_4] : memref<1x512xf32, #tpu.memory_space<vmem>>, vector<1x512xf32>
    %4 = vector.broadcast %3 : vector<1x512xf32> to vector<8x512xf32>
    %5 = arith.addf %2, %4 : vector<8x512xf32>
    %6 = tpu.iota {dimensions = array<i32: 1>} : vector<8x512xi32>
    %c400_i32 = arith.constant 400 : i32
    %7 = vector.broadcast %c400_i32 : i32 to vector<8x512xi32>
    %8 = arith.cmpi slt, %6, %7 : vector<8x512xi32>
    %cst_5 = arith.constant 0.000000e+00 : f32
    %9 = vector.broadcast %cst_5 : f32 to vector<8x512xf32>
    %10 = arith.maximumf %5, %9 : vector<8x512xf32>
    %11 = arith.select %8, %10, %5 : vector<8x512xi1>, vector<8x512xf32>
    %12 = arith.truncf %11 : vector<8x512xf32> to vector<8x512xbf16>
    %c0_6 = arith.constant 0 : index
    %c0_7 = arith.constant 0 : index
    %13 = vector.load %arg3[%c0_6, %c0_7] : memref<512x384xbf16, #tpu.memory_space<vmem>>, vector<512x384xbf16>
    %cst_8 = arith.constant dense<0.000000e+00> : vector<8x384xf32>
    %14 = tpu.matmul %12, %13, %cst_8 {dimension_numbers = #tpu.dot_dimension_numbers<[1], [0], [0], [1], [0, 0, 1, 1], [], []>} : vector<8x512xbf16>, vector<512x384xbf16>, vector<8x384xf32> -> vector<8x384xf32>
    %c0_9 = arith.constant 0 : index
    %c0_10 = arith.constant 0 : index
    %15 = vector.load %arg4[%c0_9, %c0_10] : memref<1x384xf32, #tpu.memory_space<vmem>>, vector<1x384xf32>
    %16 = vector.broadcast %15 : vector<1x384xf32> to vector<8x384xf32>
    %17 = arith.addf %14, %16 : vector<8x384xf32>
    %cst_11 = arith.constant 0.000000e+00 : f32
    %18 = vector.broadcast %cst_11 : f32 to vector<8x384xf32>
    %19 = arith.maximumf %17, %18 : vector<8x384xf32>
    %c0_12 = arith.constant 0 : index
    %c0_13 = arith.constant 0 : index
    %20 = vector.load %arg5[%c0_12, %c0_13] : memref<1x384xf32, #tpu.memory_space<vmem>>, vector<1x384xf32>
    %21 = vector.broadcast %20 : vector<1x384xf32> to vector<8x384xf32>
    %22 = arith.mulf %19, %21 : vector<8x384xf32>
    %cst_14 = arith.constant dense<0.000000e+00> : vector<8xf32>
    %23 = vector.multi_reduction <add>, %22, %cst_14 [1] : vector<8x384xf32> to vector<8xf32>
    %24 = vector.shape_cast %23 : vector<8xf32> to vector<8x1xf32>
    %c0_15 = arith.constant 0 : index
    %c0_16 = arith.constant 0 : index
    %25 = vector.load %arg6[%c0_15, %c0_16] : memref<1x1xf32, #tpu.memory_space<vmem>>, vector<1x1xf32>
    %26 = vector.broadcast %25 : vector<1x1xf32> to vector<8x1xf32>
    %27 = arith.addf %24, %26 : vector<8x1xf32>
    %c0_17 = arith.constant 0 : index
    %c0_18 = arith.constant 0 : index
    %28 = vector.load %arg7[%c0_17, %c0_18] : memref<8x1xf32, #tpu.memory_space<vmem>>, vector<8x1xf32>
    tpu.vector_store %arg7[%c0_17, %c0_18], %27 {strides = array<i32>} : memref<8x1xf32, #tpu.memory_space<vmem>>, vector<8x1xf32>,
    return
  }
}

</mosaic_0001>

<llo_original>
// kernel: tpu_custom_call.1
$region0: #{tpu_custom_call.1}
  #allocation0 [shape = 'u32[]', space=smem, size = 0x4, offset = 0x4, fixed_abs, tag = 'smem constant byte address 0x4 - core index']
  #allocation1 [shape = 'u32[144,128]{1,0:T(1,128)}', space=vmem, size = 0x12000, scoped, tag = 'internal scratch']
  #allocation2 [shape = 'f32[1,1]{1,0:T(1,128)S(1)}', space=vmem, size = 0x200, scoped, tag = 'scoped memory for tpu_custom_call.1']
  %s0 = inlined_call_operand.hbm [shape: bf16[8,20], index: 0, kind: input, shape index: {}]
  %s1 = inlined_call_operand.hbm [shape: bf16[20,512], index: 1, kind: input, shape index: {}]
  %s2 = inlined_call_operand.vmem [shape: f32[1,512], index: 2, kind: input, shape index: {}]
  %s3 = inlined_call_operand.hbm [shape: bf16[512,384], index: 3, kind: input, shape index: {}]
  %s4 = inlined_call_operand.vmem [shape: f32[1,384], index: 4, kind: input, shape index: {}]
  %s5 = inlined_call_operand.vmem [shape: f32[1,384], index: 5, kind: input, shape index: {}]
  %s6 = inlined_call_operand.<no memory space> [shape: f32[1,1], index: 6, kind: input, shape index: {}]
  %s7 = inlined_call_operand.vmem [shape: f32[8,1], index: 7, kind: output, shape index: {}]
  %s8 = sld [smem:[#allocation0]]
  $region50: #{tpu_custom_call.1} parent=0
    _
  %s10 = ssub.s32 1, %s8
  %s11 = scalar_select 0, %s10, %s8
  %v12 = vstv %s6
  %13 = vst [vmem:[#allocation2] sm:$0x1] %v12
  $region1: #{tpu_custom_call.1} parent=0
    #allocation3 [shape = 'u8[2048]{0}', space=vmem, size = 0x800, scoped, tag = 'input window, operand 0, single buffered']
    #allocation4 [shape = 's32[1]{0}', space=sflag, size = 0x4, scoped, tag = 'scoped memory for tpu_custom_call.1']
    #allocation5 [shape = 'u8[24576]{0}', space=vmem, size = 0x6000, scoped, tag = 'input window, operand 1, single buffered']
    #allocation6 [shape = 's32[1]{0}', space=sflag, size = 0x4, scoped, tag = 'scoped memory for tpu_custom_call.1']
    #allocation7 [shape = 'u8[393216]{0}', space=vmem, size = 0x60000, scoped, tag = 'input window, operand 3, single buffered']
    %14 = vsyncpa [#allocation4], 0
    %15 = vsyncpa [#allocation6], 0
    // Predicated region
    $region2: #{tpu_custom_call.1} parent=1 // pred_check
      _
    $region3: #{tpu_custom_call.1} parent=1 // pred_check_branch
      %17 = sbr.rel (0) target = $region5
    $region4: #{tpu_custom_call.1} parent=1 // pred_region
      %s19 = ssub.s32 64, 64
      %20 = vsyncadd [#allocation4], %s19
      %s22 = sshll.u32 [#allocation3], 4
      %s23 = int_to_ptr.vmem [resolvable:$true] %s22
      %25 = dma.hbm_to_vmem [thread:$0]  %s0, 64, %s23, [#allocation4]
    $region5: #{tpu_custom_call.1} parent=1 // pred_fallthru
      _
    // Predicated region
    $region6: #{tpu_custom_call.1} parent=1 // pred_check
      _
    $region7: #{tpu_custom_call.1} parent=1 // pred_check_branch
      %27 = sbr.rel (0) target = $region9
    $region8: #{tpu_custom_call.1} parent=1 // pred_region
      %s29 = ssub.s32 768, 768
      %30 = vsyncadd [#allocation6], %s29
      %s31 = sshll.u32 [#allocation5], 4
      %s32 = int_to_ptr.vmem [resolvable:$true] %s31
      %37 = dma.hbm_to_vmem [thread:$0]  %s1, 768, %s32, [#allocation6], 256, 256, 16
    $region9: #{tpu_custom_call.1} parent=1 // pred_fallthru
      _
    // Predicated region
    $region10: #{tpu_custom_call.1} parent=1 // pred_check
      _
    $region11: #{tpu_custom_call.1} parent=1 // pred_check_branch
      %39 = sbr.rel (0) target = $region13
    $region12: #{tpu_custom_call.1} parent=1 // pred_region
      _
    $region13: #{tpu_custom_call.1} parent=1 // pred_fallthru
      _
    // Predicated region
    $region14: #{tpu_custom_call.1} parent=1 // pred_check
      _
    $region15: #{tpu_custom_call.1} parent=1 // pred_check_branch
      %41 = sbr.rel (0) target = $region17
    $region16: #{tpu_custom_call.1} parent=1 // pred_region
      %s43 = ssub.s32 12288, 12288
      %44 = vsyncadd [#allocation6], %s43
      %s45 = sshll.u32 [#allocation7], 4
      %s46 = int_to_ptr.vmem [resolvable:$true] %s45
      %51 = dma.hbm_to_vmem [thread:$0]  %s3, 12288, %s46, [#allocation6], 192, 192, 12
    $region17: #{tpu_custom_call.1} parent=1 // pred_fallthru
      _
    // Predicated region
    $region18: #{tpu_custom_call.1} parent=1 // pred_check
      _
    $region19: #{tpu_custom_call.1} parent=1 // pred_check_branch
      %53 = sbr.rel (0) target = $region21
    $region20: #{tpu_custom_call.1} parent=1 // pred_region
      _
    $region21: #{tpu_custom_call.1} parent=1 // pred_fallthru
      _
    // Predicated region
    $region22: #{tpu_custom_call.1} parent=1 // pred_check
      _
    $region23: #{tpu_custom_call.1} parent=1 // pred_check_branch
      %55 = sbr.rel (0) target = $region25
    $region24: #{tpu_custom_call.1} parent=1 // pred_region
      _
    $region25: #{tpu_custom_call.1} parent=1 // pred_fallthru
      _
    // Predicated region
    $region26: #{tpu_custom_call.1} parent=1 // pred_check
      _
    $region27: #{tpu_custom_call.1} parent=1 // pred_check_branch
      %57 = sbr.rel (0) target = $region29
    $region28: #{tpu_custom_call.1} parent=1 // pred_region
      _
    $region29: #{tpu_custom_call.1} parent=1 // pred_fallthru
      _
    // Predicated region
    $region30: #{tpu_custom_call.1} parent=1 // pred_check
      _
    $region31: #{tpu_custom_call.1} parent=1 // pred_check_branch
      %59 = sbr.rel (0) target = $region33
    $region32: #{tpu_custom_call.1} parent=1 // pred_region
      %60 = dma.done [#allocation4], 64
    $region33: #{tpu_custom_call.1} parent=1 // pred_fallthru
      _
    // Predicated region
    $region34: #{tpu_custom_call.1} parent=1 // pred_check
      _
    $region35: #{tpu_custom_call.1} parent=1 // pred_check_branch
      %62 = sbr.rel (0) target = $region37
    $region36: #{tpu_custom_call.1} parent=1 // pred_region
      %63 = dma.done [#allocation6], 768
    $region37: #{tpu_custom_call.1} parent=1 // pred_fallthru
      _
    // Predicated region
    $region38: #{tpu_custom_call.1} parent=1 // pred_check
      _
    $region39: #{tpu_custom_call.1} parent=1 // pred_check_branch
      %65 = sbr.rel (0) target = $region41
    $region40: #{tpu_custom_call.1} parent=1 // pred_region
      %66 = dma.done [#allocation6], 12288
    $region41: #{tpu_custom_call.1} parent=1 // pred_fallthru
      _
    %v68 = vld [vmem:[#allocation3] sm:$0xf]
    %v69 = vld [vmem:[#allocation5] sm:$0xff]
    %v70 = vld [vmem:[#allocation5 + $0x8] sm:$0xff]
    %v71 = vld [vmem:[#allocation5 + $0x10] sm:$0xff]
    %v72 = vld [vmem:[#allocation5 + $0x18] sm:$0xff]
    %v73 = vld [vmem:[#allocation5 + $0x20] sm:$0x33]
    %v74 = vld [vmem:[#allocation5 + $0x28] sm:$0x33]
    %v75 = vld [vmem:[%s2] sm:$0xf]
    %v77 = vlaneseq
    %v78 = vshrl.u32 %v77, 7
    %v79 = vsub.s32 0, %v78
    %v80 = vrot.slane %v75, %v79
    %v81 = vlaneseq
    %v82 = vshrl.u32 %v81, 7
    %v83 = vsub.s32 1, %v82
    %v84 = vrot.slane %v75, %v83
    %v85 = vlaneseq
    %v86 = vshrl.u32 %v85, 7
    %v87 = vsub.s32 2, %v86
    %v88 = vrot.slane %v75, %v87
    %v89 = vlaneseq
    %v90 = vshrl.u32 %v89, 7
    %v91 = vsub.s32 3, %v90
    %v92 = vrot.slane %v75, %v91
    %v103 = vunpack.c.l.b16 %v69
    %v104 = vunpack.c.h.b16 %v69
    %v105 = vunpack.c.l.b16 %v70
    %v106 = vunpack.c.h.b16 %v70
    %v107 = vunpack.c.l.b16 %v71
    %v108 = vunpack.c.h.b16 %v71
    %v109 = vunpack.c.l.b16 %v72
    %v110 = vunpack.c.h.b16 %v72
    %v111 = vunpack.c.l.b16 %v73
    %v112 = vunpack.c.h.b16 %v73
    %v113 = vunpack.c.l.b16 %v74
    %v114 = vunpack.c.h.b16 %v74
    %v115 = vpack.c.b16 %v107, %v103
    %v116 = vpack.c.b16 %v108, %v104
    %v117 = vpack.c.b16 %v109, %v105
    %v118 = vpack.c.b16 %v110, %v106
    %v119 = vpack.c.b16 %v111, %v111
    %v120 = vpack.c.b16 %v112, %v112
    %v121 = vpack.c.b16 %v113, %v113
    %v122 = vpack.c.b16 %v114, %v114
    %vm127 = vcmask 162816
    %v129 = vsel %vm127, %v68, 0
    %vm131 = vcmask 1041408
    %v133 = vsel %vm131, %v119, 0
    %v136 = vsel %vm131, %v120, 0
    %v139 = vsel %vm131, %v121, 0
    %v142 = vsel %vm131, %v122, 0
    %144 = vmatprep.subr.bf16.mxu0 0
    %145 = vmatpush1.bf16.msra.mxu0 0
    %146 = vmatprep.subr.bf16.mxu0 0
    %147 = vmatpush1.bf16.msra.mxu0 0
    %148 = vmatprep.subr.bf16.mxu0 0
    %149 = vmatpush1.bf16.msra.mxu0 0
    %150 = vmatprep.subr.bf16.mxu0 0
    %151 = vmatpush1.bf16.msra.mxu0 0
    %152 = vmatprep.subr.bf16.mxu0 0
    %153 = vmatpush1.bf16.msra.mxu0 0
    %154 = vmatprep.subr.bf16.mxu0 0
    %155 = vmatpush1.bf16.msra.mxu0 0
    %156 = vmatprep.subr.bf16.mxu0 %v136
    %157 = vmatpush1.bf16.msra.mxu0 %v133
    %158 = vmatprep.subr.bf16.mxu0 %v116
    %159 = vmatpush1.bf16.msra.mxu0 %v115
    %160 = vmatprep.subr.bf16.mxu0 0
    %161 = vmatpush2.bf16.msra.mxu0 0
    %162 = vmatprep.subr.bf16.mxu0 0
    %163 = vmatpush2.bf16.msra.mxu0 0
    %164 = vmatprep.subr.bf16.mxu0 0
    %165 = vmatpush2.bf16.msra.mxu0 0
    %166 = vmatprep.subr.bf16.mxu0 0
    %167 = vmatpush2.bf16.msra.mxu0 0
    %168 = vmatprep.subr.bf16.mxu0 0
    %169 = vmatpush2.bf16.msra.mxu0 0
    %170 = vmatprep.subr.bf16.mxu0 0
    %171 = vmatpush2.bf16.msra.mxu0 0
    %172 = vmatprep.subr.bf16.mxu0 0
    %173 = vmatpush2.bf16.msra.mxu0 0
    %174 = vmatprep.subr.bf16.mxu0 0
    %175 = vmatpush2.bf16.msra.mxu0 0
    %176 = vmatprep.mubr.bf16.mxu0 0
    %177 = vmatmul.mubr.bf16.gmra.mxu0 %v129
    %v178 = vpop.f32.mrf.mxu0
    %v179 = vadd.f32 %v80, %v178
    %v180 = vpop.f32.mrf.mxu0
    %v181 = vadd.f32 %v84, %v180
    %v182 = vpop.f32.mrf.mxu0
    %v183 = vpop.f32.mrf.mxu0
    %184 = vdwg.mxu0
    %185 = vmatprep.subr.bf16.mxu0 0
    %186 = vmatpush1.bf16.msra.mxu0 0
    %187 = vmatprep.subr.bf16.mxu0 0
    %188 = vmatpush1.bf16.msra.mxu0 0
    %189 = vmatprep.subr.bf16.mxu0 0
    %190 = vmatpush1.bf16.msra.mxu0 0
    %191 = vmatprep.subr.bf16.mxu0 0
    %192 = vmatpush1.bf16.msra.mxu0 0
    %193 = vmatprep.subr.bf16.mxu0 0
    %194 = vmatpush1.bf16.msra.mxu0 0
    %195 = vmatprep.subr.bf16.mxu0 0
    %196 = vmatpush1.bf16.msra.mxu0 0
    %197 = vmatprep.subr.bf16.mxu0 %v142
    %198 = vmatpush1.bf16.msra.mxu0 %v139
    %199 = vmatprep.subr.bf16.mxu0 %v118
    %200 = vmatpush1.bf16.msra.mxu0 %v117
    %201 = vmatprep.subr.bf16.mxu0 0
    %202 = vmatpush2.bf16.msra.mxu0 0
    %203 = vmatprep.subr.bf16.mxu0 0
    %204 = vmatpush2.bf16.msra.mxu0 0
    %205 = vmatprep.subr.bf16.mxu0 0
    %206 = vmatpush2.bf16.msra.mxu0 0
    %207 = vmatprep.subr.bf16.mxu0 0
    %208 = vmatpush2.bf16.msra.mxu0 0
    %209 = vmatprep.subr.bf16.mxu0 0
    %210 = vmatpush2.bf16.msra.mxu0 0
    %211 = vmatprep.subr.bf16.mxu0 0
    %212 = vmatpush2.bf16.msra.mxu0 0
    %213 = vmatprep.subr.bf16.mxu0 0
    %214 = vmatpush2.bf16.msra.mxu0 0
    %215 = vmatprep.subr.bf16.mxu0 0
    %216 = vmatpush2.bf16.msra.mxu0 0
    %217 = vmatprep.mubr.bf16.mxu0 0
    %218 = vmatmul.mubr.bf16.gmra.mxu0 %v129
    %v219 = vpop.f32.mrf.mxu0
    %v220 = vadd.f32 %v88, %v219
    %v221 = vpop.f32.mrf.mxu0
    %v222 = vadd.f32 %v92, %v221
    %v223 = vpop.f32.mrf.mxu0
    %v224 = vpop.f32.mrf.mxu0
    %225 = vdwg.mxu0
    %v226 = vlaneseq
    %v227 = vand.u32 %v226, 127
    %v228 = vadd.s32 %v227, 128
    %v229 = vadd.s32 %v227, 256
    %v230 = vadd.s32 %v227, 384
    %vm231 = vcmp.lt.s32.totalorder %v227, 400
    %vm232 = vcmp.lt.s32.totalorder %v228, 400
    %vm233 = vcmp.lt.s32.totalorder %v229, 400
    %vm234 = vcmp.lt.s32.totalorder %v230, 400
    %v235 = vmax.f32 %v179, 0.0
    %v236 = vmax.f32 %v181, 0.0
    %v237 = vmax.f32 %v220, 0.0
    %v238 = vmax.f32 %v222, 0.0
    %v239 = vsel %vm231, %v235, %v179
    %v240 = vsel %vm232, %v236, %v181
    %v241 = vsel %vm233, %v237, %v220
    %v242 = vsel %vm234, %v238, %v222
    %v243 = vpack.c.bf16 %v239, %v239
    %v244 = vpack.c.bf16 %v240, %v240
    %v245 = vpack.c.bf16 %v241, %v241
    %v246 = vpack.c.bf16 %v242, %v242
    %v247 = vld [vmem:[#allocation7] sm:$0xff]
    %v248 = vld [vmem:[#allocation7 + $0x8] sm:$0xf]
    %v249 = vld [vmem:[#allocation7 + $0xc] sm:$0xff]
    %v250 = vld [vmem:[#allocation7 + $0x14] sm:$0xf]
    %v251 = vld [vmem:[#allocation7 + $0x18] sm:$0xff]
    %v252 = vld [vmem:[#allocation7 + $0x20] sm:$0xf]
    %v253 = vld [vmem:[#allocation7 + $0x24] sm:$0xff]
    %v254 = vld [vmem:[#allocation7 + $0x2c] sm:$0xf]
    %v255 = vld [vmem:[#allocation7 + $0x30] sm:$0xff]
    %v256 = vld [vmem:[#allocation7 + $0x38] sm:$0xf]
    %v257 = vld [vmem:[#allocation7 + $0x3c] sm:$0xff]
    %v258 = vld [vmem:[#allocation7 + $0x44] sm:$0xf]
    %v259 = vld [vmem:[#allocation7 + $0x48] sm:$0xff]
    %v260 = vld [vmem:[#allocation7 + $0x50] sm:$0xf]
    %v261 = vld [vmem:[#allocation7 + $0x54] sm:$0xff]
    %v262 = vld [vmem:[#allocation7 + $0x5c] sm:$0xf]
    %v263 = vld [vmem:[#allocation7 + $0x60] sm:$0xff]
    %v264 = vld [vmem:[#allocation7 + $0x68] sm:$0xf]
    %v265 = vld [vmem:[#allocation7 + $0x6c] sm:$0xff]
    %v266 = vld [vmem:[#allocation7 + $0x74] sm:$0xf]
    %v267 = vld [vmem:[#allocation7 + $0x78] sm:$0xff]
    %v268 = vld [vmem:[#allocation7 + $0x80] sm:$0xf]
    %v269 = vld [vmem:[#allocation7 + $0x84] sm:$0xff]
    %v270 = vld [vmem:[#allocation7 + $0x8c] sm:$0xf]
    %v271 = vld [vmem:[#allocation7 + $0x90] sm:$0xff]
    %v272 = vld [vmem:[#allocation7 + $0x98] sm:$0xf]
    %v273 = vld [vmem:[#allocation7 + $0x9c] sm:$0xff]
    %v274 = vld [vmem:[#allocation7 + $0xa4] sm:$0xf]
    %v275 = vld [vmem:[#allocation7 + $0xa8] sm:$0xff]
    %v276 = vld [vmem:[#allocation7 + $0xb0] sm:$0xf]
    %v277 = vld [vmem:[#allocation7 + $0xb4] sm:$0xff]
    %v278 = vld [vmem:[#allocation7 + $0xbc] sm:$0xf]
    %v279 = vld [vmem:[#allocation7 + $0xc0] sm:$0xff]
    %v280 = vld [vmem:[#allocation7 + $0xc8] sm:$0xf]
    %v281 = vld [vmem:[#allocation7 + $0xcc] sm:$0xff]
    %v282 = vld [vmem:[#allocation7 + $0xd4] sm:$0xf]
    %v283 = vld [vmem:[#allocation7 + $0xd8] sm:$0xff]
    %v284 = vld [vmem:[#allocation7 + $0xe0] sm:$0xf]
    %v285 = vld [vmem:[#allocation7 + $0xe4] sm:$0xff]
    %v286 = vld [vmem:[#allocation7 + $0xec] sm:$0xf]
    %v287 = vld [vmem:[#allocation7 + $0xf0] sm:$0xff]
    %v288 = vld [vmem:[#allocation7 + $0xf8] sm:$0xf]
    %v289 = vld [vmem:[#allocation7 + $0xfc] sm:$0xff]
    %v290 = vld [vmem:[#allocation7 + $0x104] sm:$0xf]
    %v291 = vld [vmem:[#allocation7 + $0x108] sm:$0xff]
    %v292 = vld [vmem:[#allocation7 + $0x110] sm:$0xf]
    %v293 = vld [vmem:[#allocation7 + $0x114] sm:$0xff]
    %v294 = vld [vmem:[#allocation7 + $0x11c] sm:$0xf]
    %v295 = vld [vmem:[#allocation7 + $0x120] sm:$0xff]
    %v296 = vld [vmem:[#allocation7 + $0x128] sm:$0xf]
    %v297 = vld [vmem:[#allocation7 + $0x12c] sm:$0xff]
    %v298 = vld [vmem:[#allocation7 + $0x134] sm:$0xf]
    %v299 = vld [vmem:[#allocation7 + $0x138] sm:$0xff]
    %v300 = vld [vmem:[#allocation7 + $0x140] sm:$0xf]
    %v301 = vld [vmem:[#allocation7 + $0x144] sm:$0xff]
    %v302 = vld [vmem:[#allocation7 + $0x14c] sm:$0xf]
    %v303 = vld [vmem:[#allocation7 + $0x150] sm:$0xff]
    %v304 = vld [vmem:[#allocation7 + $0x158] sm:$0xf]
    %v305 = vld [vmem:[#allocation7 + $0x15c] sm:$0xff]
    %v306 = vld [vmem:[#allocation7 + $0x164] sm:$0xf]
    %v307 = vld [vmem:[#allocation7 + $0x168] sm:$0xff]
    %v308 = vld [vmem:[#allocation7 + $0x170] sm:$0xf]
    %v309 = vld [vmem:[#allocation7 + $0x174] sm:$0xff]
    %v310 = vld [vmem:[#allocation7 + $0x17c] sm:$0xf]
    %v311 = vld [vmem:[#allocation7 + $0x180] sm:$0xff]
    %v312 = vld [vmem:[#allocation7 + $0x188] sm:$0xf]
    %v313 = vld [vmem:[#allocation7 + $0x18c] sm:$0xff]
    %v314 = vld [vmem:[#allocation7 + $0x194] sm:$0xf]
    %v315 = vld [vmem:[#allocation7 + $0x198] sm:$0xff]
    %v316 = vld [vmem:[#allocation7 + $0x1a0] sm:$0xf]
    %v317 = vld [vmem:[#allocation7 + $0x1a4] sm:$0xff]
    %v318 = vld [vmem:[#allocation7 + $0x1ac] sm:$0xf]
    %v319 = vld [vmem:[#allocation7 + $0x1b0] sm:$0xff]
    %v320 = vld [vmem:[#allocation7 + $0x1b8] sm:$0xf]
    %v321 = vld [vmem:[#allocation7 + $0x1bc] sm:$0xff]
    %v322 = vld [vmem:[#allocation7 + $0x1c4] sm:$0xf]
    %v323 = vld [vmem:[#allocation7 + $0x1c8] sm:$0xff]
    %v324 = vld [vmem:[#allocation7 + $0x1d0] sm:$0xf]
    %v325 = vld [vmem:[#allocation7 + $0x1d4] sm:$0xff]
    %v326 = vld [vmem:[#allocation7 + $0x1dc] sm:$0xf]
    %v327 = vld [vmem:[#allocation7 + $0x1e0] sm:$0xff]
    %v328 = vld [vmem:[#allocation7 + $0x1e8] sm:$0xf]
    %v329 = vld [vmem:[#allocation7 + $0x1ec] sm:$0xff]
    %v330 = vld [vmem:[#allocation7 + $0x1f4] sm:$0xf]
    %v331 = vld [vmem:[#allocation7 + $0x1f8] sm:$0xff]
    %v332 = vld [vmem:[#allocation7 + $0x200] sm:$0xf]
    %v333 = vld [vmem:[#allocation7 + $0x204] sm:$0xff]
    %v334 = vld [vmem:[#allocation7 + $0x20c] sm:$0xf]
    %v335 = vld [vmem:[#allocation7 + $0x210] sm:$0xff]
    %v336 = vld [vmem:[#allocation7 + $0x218] sm:$0xf]
    %v337 = vld [vmem:[#allocation7 + $0x21c] sm:$0xff]
    %v338 = vld [vmem:[#allocation7 + $0x224] sm:$0xf]
    %v339 = vld [vmem:[#allocation7 + $0x228] sm:$0xff]
    %v340 = vld [vmem:[#allocation7 + $0x230] sm:$0xf]
    %v341 = vld [vmem:[#allocation7 + $0x234] sm:$0xff]
    %v342 = vld [vmem:[#allocation7 + $0x23c] sm:$0xf]
    %v343 = vld [vmem:[#allocation7 + $0x240] sm:$0xff]
    %v344 = vld [vmem:[#allocation7 + $0x248] sm:$0xf]
    %v345 = vld [vmem:[#allocation7 + $0x24c] sm:$0xff]
    %v346 = vld [vmem:[#allocation7 + $0x254] sm:$0xf]
    %v347 = vld [vmem:[#allocation7 + $0x258] sm:$0xff]
    %v348 = vld [vmem:[#allocation7 + $0x260] sm:$0xf]
    %v349 = vld [vmem:[#allocation7 + $0x264] sm:$0xff]
    %v350 = vld [vmem:[#allocation7 + $0x26c] sm:$0xf]
    %v351 = vld [vmem:[#allocation7 + $0x270] sm:$0xff]
    %v352 = vld [vmem:[#allocation7 + $0x278] sm:$0xf]
    %v353 = vld [vmem:[#allocation7 + $0x27c] sm:$0xff]
    %v354 = vld [vmem:[#allocation7 + $0x284] sm:$0xf]
    %v355 = vld [vmem:[#allocation7 + $0x288] sm:$0xff]
    %v356 = vld [vmem:[#allocation7 + $0x290] sm:$0xf]
    %v357 = vld [vmem:[#allocation7 + $0x294] sm:$0xff]
    %v358 = vld [vmem:[#allocation7 + $0x29c] sm:$0xf]
    %v359 = vld [vmem:[#allocation7 + $0x2a0] sm:$0xff]
    %v360 = vld [vmem:[#allocation7 + $0x2a8] sm:$0xf]
    %v361 = vld [vmem:[#allocation7 + $0x2ac] sm:$0xff]
    %v362 = vld [vmem:[#allocation7 + $0x2b4] sm:$0xf]
    %v363 = vld [vmem:[#allocation7 + $0x2b8] sm:$0xff]
    %v364 = vld [vmem:[#allocation7 + $0x2c0] sm:$0xf]
    %v365 = vld [vmem:[#allocation7 + $0x2c4] sm:$0xff]
    %v366 = vld [vmem:[#allocation7 + $0x2cc] sm:$0xf]
    %v367 = vld [vmem:[#allocation7 + $0x2d0] sm:$0xff]
    %v368 = vld [vmem:[#allocation7 + $0x2d8] sm:$0xf]
    %v369 = vld [vmem:[#allocation7 + $0x2dc] sm:$0xff]
    %v370 = vld [vmem:[#allocation7 + $0x2e4] sm:$0xf]
    %v371 = vld [vmem:[#allocation7 + $0x2e8] sm:$0xff]
    %v372 = vld [vmem:[#allocation7 + $0x2f0] sm:$0xf]
    %v373 = vld [vmem:[#allocation7 + $0x2f4] sm:$0xff]
    %v374 = vld [vmem:[#allocation7 + $0x2fc] sm:$0xf]
    %v375 = vld [vmem:[%s4] sm:$0x7]
    %v377 = vlaneseq
    %v378 = vshrl.u32 %v377, 7
    %v379 = vsub.s32 0, %v378
    %v380 = vrot.slane %v375, %v379
    %v381 = vlaneseq
    %v382 = vshrl.u32 %v381, 7
    %v383 = vsub.s32 1, %v382
    %v384 = vrot.slane %v375, %v383
    %v385 = vlaneseq
    %v386 = vshrl.u32 %v385, 7
    %v387 = vsub.s32 2, %v386
    %v388 = vrot.slane %v375, %v387
    %v520 = vunpack.c.l.b16 %v247
    %v521 = vunpack.c.h.b16 %v247
    %v522 = vunpack.c.l.b16 %v248
    %v523 = vunpack.c.l.b16 %v249
    %v524 = vunpack.c.h.b16 %v249
    %v525 = vunpack.c.l.b16 %v250
    %v526 = vunpack.c.l.b16 %v251
    %v527 = vunpack.c.h.b16 %v251
    %v528 = vunpack.c.l.b16 %v252
    %v529 = vunpack.c.l.b16 %v253
    %v530 = vunpack.c.h.b16 %v253
    %v531 = vunpack.c.l.b16 %v254
    %v532 = vunpack.c.l.b16 %v255
    %v533 = vunpack.c.h.b16 %v255
    %v534 = vunpack.c.l.b16 %v256
    %v535 = vunpack.c.l.b16 %v257
    %v536 = vunpack.c.h.b16 %v257
    %v537 = vunpack.c.l.b16 %v258
    %v538 = vunpack.c.l.b16 %v259
    %v539 = vunpack.c.h.b16 %v259
    %v540 = vunpack.c.l.b16 %v260
    %v541 = vunpack.c.l.b16 %v261
    %v542 = vunpack.c.h.b16 %v261
    %v543 = vunpack.c.l.b16 %v262
    %v544 = vunpack.c.l.b16 %v263
    %v545 = vunpack.c.h.b16 %v263
    %v546 = vunpack.c.l.b16 %v264
    %v547 = vunpack.c.l.b16 %v265
    %v548 = vunpack.c.h.b16 %v265
    %v549 = vunpack.c.l.b16 %v266
    %v550 = vunpack.c.l.b16 %v267
    %v551 = vunpack.c.h.b16 %v267
    %v552 = vunpack.c.l.b16 %v268
    %v553 = vunpack.c.l.b16 %v269
    %v554 = vunpack.c.h.b16 %v269
    %v555 = vunpack.c.l.b16 %v270
    %v556 = vunpack.c.l.b16 %v271
    %v557 = vunpack.c.h.b16 %v271
    %v558 = vunpack.c.l.b16 %v272
    %v559 = vunpack.c.l.b16 %v273
    %v560 = vunpack.c.h.b16 %v273
    %v561 = vunpack.c.l.b16 %v274
    %v562 = vunpack.c.l.b16 %v275
    %v563 = vunpack.c.h.b16 %v275
    %v564 = vunpack.c.l.b16 %v276
    %v565 = vunpack.c.l.b16 %v277
    %v566 = vunpack.c.h.b16 %v277
    %v567 = vunpack.c.l.b16 %v278
    %v568 = vunpack.c.l.b16 %v279
    %v569 = vunpack.c.h.b16 %v279
    %v570 = vunpack.c.l.b16 %v280
    %v571 = vunpack.c.l.b16 %v281
    %v572 = vunpack.c.h.b16 %v281
    %v573 = vunpack.c.l.b16 %v282
    %v574 = vunpack.c.l.b16 %v283
    %v575 = vunpack.c.h.b16 %v283
    %v576 = vunpack.c.l.b16 %v284
    %v577 = vunpack.c.l.b16 %v285
    %v578 = vunpack.c.h.b16 %v285
    %v579 = vunpack.c.l.b16 %v286
    %v580 = vunpack.c.l.b16 %v287
    %v581 = vunpack.c.h.b16 %v287
    %v582 = vunpack.c.l.b16 %v288
    %v583 = vunpack.c.l.b16 %v289
    %v584 = vunpack.c.h.b16 %v289
    %v585 = vunpack.c.l.b16 %v290
    %v586 = vunpack.c.l.b16 %v291
    %v587 = vunpack.c.h.b16 %v291
    %v588 = vunpack.c.l.b16 %v292
    %v589 = vunpack.c.l.b16 %v293
    %v590 = vunpack.c.h.b16 %v293
    %v591 = vunpack.c.l.b16 %v294
    %v592 = vunpack.c.l.b16 %v295
    %v593 = vunpack.c.h.b16 %v295
    %v594 = vunpack.c.l.b16 %v296
    %v595 = vunpack.c.l.b16 %v297
    %v596 = vunpack.c.h.b16 %v297
    %v597 = vunpack.c.l.b16 %v298
    %v598 = vunpack.c.l.b16 %v299
    %v599 = vunpack.c.h.b16 %v299
    %v600 = vunpack.c.l.b16 %v300
    %v601 = vunpack.c.l.b16 %v301
    %v602 = vunpack.c.h.b16 %v301
    %v603 = vunpack.c.l.b16 %v302
    %v604 = vunpack.c.l.b16 %v303
    %v605 = vunpack.c.h.b16 %v303
    %v606 = vunpack.c.l.b16 %v304
    %v607 = vunpack.c.l.b16 %v305
    %v608 = vunpack.c.h.b16 %v305
    %v609 = vunpack.c.l.b16 %v306
    %v610 = vunpack.c.l.b16 %v307
    %v611 = vunpack.c.h.b16 %v307
    %v612 = vunpack.c.l.b16 %v308
    %v613 = vunpack.c.l.b16 %v309
    %v614 = vunpack.c.h.b16 %v309
    %v615 = vunpack.c.l.b16 %v310
    %v616 = vunpack.c.l.b16 %v311
    %v617 = vunpack.c.h.b16 %v311
    %v618 = vunpack.c.l.b16 %v312
    %v619 = vunpack.c.l.b16 %v313
    %v620 = vunpack.c.h.b16 %v313
    %v621 = vunpack.c.l.b16 %v314
    %v622 = vunpack.c.l.b16 %v315
    %v623 = vunpack.c.h.b16 %v315
    %v624 = vunpack.c.l.b16 %v316
    %v625 = vunpack.c.l.b16 %v317
    %v626 = vunpack.c.h.b16 %v317
    %v627 = vunpack.c.l.b16 %v318
    %v628 = vunpack.c.l.b16 %v319
    %v629 = vunpack.c.h.b16 %v319
    %v630 = vunpack.c.l.b16 %v320
    %v631 = vunpack.c.l.b16 %v321
    %v632 = vunpack.c.h.b16 %v321
    %v633 = vunpack.c.l.b16 %v322
    %v634 = vunpack.c.l.b16 %v323
    %v635 = vunpack.c.h.b16 %v323
    %v636 = vunpack.c.l.b16 %v324
    %v637 = vunpack.c.l.b16 %v325
    %v638 = vunpack.c.h.b16 %v325
    %v639 = vunpack.c.l.b16 %v326
    %v640 = vunpack.c.l.b16 %v327
    %v641 = vunpack.c.h.b16 %v327
    %v642 = vunpack.c.l.b16 %v328
    %v643 = vunpack.c.l.b16 %v329
    %v644 = vunpack.c.h.b16 %v329
    %v645 = vunpack.c.l.b16 %v330
    %v646 = vunpack.c.l.b16 %v331
    %v647 = vunpack.c.h.b16 %v331
    %v648 = vunpack.c.l.b16 %v332
    %v649 = vunpack.c.l.b16 %v333
    %v650 = vunpack.c.h.b16 %v333
    %v651 = vunpack.c.l.b16 %v334
    %v652 = vunpack.c.l.b16 %v335
    %v653 = vunpack.c.h.b16 %v335
    %v654 = vunpack.c.l.b16 %v336
    %v655 = vunpack.c.l.b16 %v337
    %v656 = vunpack.c.h.b16 %v337
    %v657 = vunpack.c.l.b16 %v338
    %v658 = vunpack.c.l.b16 %v339
    %v659 = vunpack.c.h.b16 %v339
    %v660 = vunpack.c.l.b16 %v340
    %v661 = vunpack.c.l.b16 %v341
    %v662 = vunpack.c.h.b16 %v341
    %v663 = vunpack.c.l.b16 %v342
    %v664 = vunpack.c.l.b16 %v343
    %v665 = vunpack.c.h.b16 %v343
    %v666 = vunpack.c.l.b16 %v344
    %v667 = vunpack.c.l.b16 %v345
    %v668 = vunpack.c.h.b16 %v345
    %v669 = vunpack.c.l.b16 %v346
    %v670 = vunpack.c.l.b16 %v347
    %v671 = vunpack.c.h.b16 %v347
    %v672 = vunpack.c.l.b16 %v348
    %v673 = vunpack.c.l.b16 %v349
    %v674 = vunpack.c.h.b16 %v349
    %v675 = vunpack.c.l.b16 %v350
    %v676 = vunpack.c.l.b16 %v351
    %v677 = vunpack.c.h.b16 %v351
    %v678 = vunpack.c.l.b16 %v352
    %v679 = vunpack.c.l.b16 %v353
    %v680 = vunpack.c.h.b16 %v353
    %v681 = vunpack.c.l.b16 %v354
    %v682 = vunpack.c.l.b16 %v355
    %v683 = vunpack.c.h.b16 %v355
    %v684 = vunpack.c.l.b16 %v356
    %v685 = vunpack.c.l.b16 %v357
    %v686 = vunpack.c.h.b16 %v357
    %v687 = vunpack.c.l.b16 %v358
    %v688 = vunpack.c.l.b16 %v359
    %v689 = vunpack.c.h.b16 %v359
    %v690 = vunpack.c.l.b16 %v360
    %v691 = vunpack.c.l.b16 %v361
    %v692 = vunpack.c.h.b16 %v361
    %v693 = vunpack.c.l.b16 %v362
    %v694 = vunpack.c.l.b16 %v363
    %v695 = vunpack.c.h.b16 %v363
    %v696 = vunpack.c.l.b16 %v364
    %v697 = vunpack.c.l.b16 %v365
    %v698 = vunpack.c.h.b16 %v365
    %v699 = vunpack.c.l.b16 %v366
    %v700 = vunpack.c.l.b16 %v367
    %v701 = vunpack.c.h.b16 %v367
    %v702 = vunpack.c.l.b16 %v368
    %v703 = vunpack.c.l.b16 %v369
    %v704 = vunpack.c.h.b16 %v369
    %v705 = vunpack.c.l.b16 %v370
    %v706 = vunpack.c.l.b16 %v371
    %v707 = vunpack.c.h.b16 %v371
    %v708 = vunpack.c.l.b16 %v372
    %v709 = vunpack.c.l.b16 %v373
    %v710 = vunpack.c.h.b16 %v373
    %v711 = vunpack.c.l.b16 %v374
    %v712 = vpack.c.b16 %v523, %v520
    %v713 = vpack.c.b16 %v524, %v521
    %v714 = vpack.c.b16 %v525, %v522
    %v715 = vpack.c.b16 %v529, %v526
    %v716 = vpack.c.b16 %v530, %v527
    %v717 = vpack.c.b16 %v531, %v528
    %v718 = vpack.c.b16 %v535, %v532
    %v719 = vpack.c.b16 %v536, %v533
    %v720 = vpack.c.b16 %v537, %v534
    %v721 = vpack.c.b16 %v541, %v538
    %v722 = vpack.c.b16 %v542, %v539
    %v723 = vpack.c.b16 %v543, %v540
    %v724 = vpack.c.b16 %v547, %v544
    %v725 = vpack.c.b16 %v548, %v545
    %v726 = vpack.c.b16 %v549, %v546
    %v727 = vpack.c.b16 %v553, %v550
    %v728 = vpack.c.b16 %v554, %v551
    %v729 = vpack.c.b16 %v555, %v552
    %v730 = vpack.c.b16 %v559, %v556
    %v731 = vpack.c.b16 %v560, %v557
    %v732 = vpack.c.b16 %v561, %v558
    %v733 = vpack.c.b16 %v565, %v562
    %v734 = vpack.c.b16 %v566, %v563
    %v735 = vpack.c.b16 %v567, %v564
    %v736 = vpack.c.b16 %v571, %v568
    %v737 = vpack.c.b16 %v572, %v569
    %v738 = vpack.c.b16 %v573, %v570
    %v739 = vpack.c.b16 %v577, %v574
    %v740 = vpack.c.b16 %v578, %v575
    %v741 = vpack.c.b16 %v579, %v576
    %v742 = vpack.c.b16 %v583, %v580
    %v743 = vpack.c.b16 %v584, %v581
    %v744 = vpack.c.b16 %v585, %v582
    %v745 = vpack.c.b16 %v589, %v586
    %v746 = vpack.c.b16 %v590, %v587
    %v747 = vpack.c.b16 %v591, %v588
    %v748 = vpack.c.b16 %v595, %v592
    %v749 = vpack.c.b16 %v596, %v593
    %v750 = vpack.c.b16 %v597, %v594
    %v751 = vpack.c.b16 %v601, %v598
    %v752 = vpack.c.b16 %v602, %v599
    %v753 = vpack.c.b16 %v603, %v600
    %v754 = vpack.c.b16 %v607, %v604
    %v755 = vpack.c.b16 %v608, %v605
    %v756 = vpack.c.b16 %v609, %v606
    %v757 = vpack.c.b16 %v613, %v610
    %v758 = vpack.c.b16 %v614, %v611
    %v759 = vpack.c.b16 %v615, %v612
    %v760 = vpack.c.b16 %v619, %v616
    %v761 = vpack.c.b16 %v620, %v617
    %v762 = vpack.c.b16 %v621, %v618
    %v763 = vpack.c.b16 %v625, %v622
    %v764 = vpack.c.b16 %v626, %v623
    %v765 = vpack.c.b16 %v627, %v624
    %v766 = vpack.c.b16 %v631, %v628
    %v767 = vpack.c.b16 %v632, %v629
    %v768 = vpack.c.b16 %v633, %v630
    %v769 = vpack.c.b16 %v637, %v634
    %v770 = vpack.c.b16 %v638, %v635
    %v771 = vpack.c.b16 %v639, %v636
    %v772 = vpack.c.b16 %v643, %v640
    %v773 = vpack.c.b16 %v644, %v641
    %v774 = vpack.c.b16 %v645, %v642
    %v775 = vpack.c.b16 %v649, %v646
    %v776 = vpack.c.b16 %v650, %v647
    %v777 = vpack.c.b16 %v651, %v648
    %v778 = vpack.c.b16 %v655, %v652
    %v779 = vpack.c.b16 %v656, %v653
    %v780 = vpack.c.b16 %v657, %v654
    %v781 = vpack.c.b16 %v661, %v658
    %v782 = vpack.c.b16 %v662, %v659
    %v783 = vpack.c.b16 %v663, %v660
    %v784 = vpack.c.b16 %v667, %v664
    %v785 = vpack.c.b16 %v668, %v665
    %v786 = vpack.c.b16 %v669, %v666
    %v787 = vpack.c.b16 %v673, %v670
    %v788 = vpack.c.b16 %v674, %v671
    %v789 = vpack.c.b16 %v675, %v672
    %v790 = vpack.c.b16 %v679, %v676
    %v791 = vpack.c.b16 %v680, %v677
    %v792 = vpack.c.b16 %v681, %v678
    %v793 = vpack.c.b16 %v685, %v682
    %v794 = vpack.c.b16 %v686, %v683
    %v795 = vpack.c.b16 %v687, %v684
    %v796 = vpack.c.b16 %v691, %v688
    %v797 = vpack.c.b16 %v692, %v689
    %v798 = vpack.c.b16 %v693, %v690
    %v799 = vpack.c.b16 %v697, %v694
    %v800 = vpack.c.b16 %v698, %v695
    %v801 = vpack.c.b16 %v699, %v696
    %v802 = vpack.c.b16 %v703, %v700
    %v803 = vpack.c.b16 %v704, %v701
    %v804 = vpack.c.b16 %v705, %v702
    %v805 = vpack.c.b16 %v709, %v706
    %v806 = vpack.c.b16 %v710, %v707
    %v807 = vpack.c.b16 %v711, %v708
    %904 = vmatprep.subr.bf16.mxu0 %v734
    %905 = vmatpush1.bf16.msra.mxu0 %v733
    %906 = vmatprep.subr.bf16.mxu0 %v731
    %907 = vmatpush1.bf16.msra.mxu0 %v730
    %908 = vmatprep.subr.bf16.mxu0 %v728
    %909 = vmatpush1.bf16.msra.mxu0 %v727
    %910 = vmatprep.subr.bf16.mxu0 %v725
    %911 = vmatpush1.bf16.msra.mxu0 %v724
    %912 = vmatprep.subr.bf16.mxu0 %v722
    %913 = vmatpush1.bf16.msra.mxu0 %v721
    %914 = vmatprep.subr.bf16.mxu0 %v719
    %915 = vmatpush1.bf16.msra.mxu0 %v718
    %916 = vmatprep.subr.bf16.mxu0 %v716
    %917 = vmatpush1.bf16.msra.mxu0 %v715
    %918 = vmatprep.subr.bf16.mxu0 %v713
    %919 = vmatpush1.bf16.msra.mxu0 %v712
    %920 = vmatprep.subr.bf16.mxu0 %v758
    %921 = vmatpush2.bf16.msra.mxu0 %v757
    %922 = vmatprep.subr.bf16.mxu0 %v755
    %923 = vmatpush2.bf16.msra.mxu0 %v754
    %924 = vmatprep.subr.bf16.mxu0 %v752
    %925 = vmatpush2.bf16.msra.mxu0 %v751
    %926 = vmatprep.subr.bf16.mxu0 %v749
    %927 = vmatpush2.bf16.msra.mxu0 %v748
    %928 = vmatprep.subr.bf16.mxu0 %v746
    %929 = vmatpush2.bf16.msra.mxu0 %v745
    %930 = vmatprep.subr.bf16.mxu0 %v743
    %931 = vmatpush2.bf16.msra.mxu0 %v742
    %932 = vmatprep.subr.bf16.mxu0 %v740
    %933 = vmatpush2.bf16.msra.mxu0 %v739
    %934 = vmatprep.subr.bf16.mxu0 %v737
    %935 = vmatpush2.bf16.msra.mxu0 %v736
    %936 = vmatprep.mubr.bf16.mxu0 %v244
    %937 = vmatmul.mubr.bf16.gmra.mxu0 %v243
    %v938 = vpop.f32.mrf.mxu0
    %v939 = vadd.f32 %v380, %v938
    %v940 = vpop.f32.mrf.mxu0
    %v941 = vadd.f32 %v384, %v940
    %v942 = vpop.f32.mrf.mxu0
    %v943 = vpop.f32.mrf.mxu0
    %944 = vdwg.mxu0
    %945 = vmatprep.subr.bf16.mxu0 %v782
    %946 = vmatpush1.bf16.msra.mxu0 %v781
    %947 = vmatprep.subr.bf16.mxu0 %v779
    %948 = vmatpush1.bf16.msra.mxu0 %v778
    %949 = vmatprep.subr.bf16.mxu0 %v776
    %950 = vmatpush1.bf16.msra.mxu0 %v775
    %951 = vmatprep.subr.bf16.mxu0 %v773
    %952 = vmatpush1.bf16.msra.mxu0 %v772
    %953 = vmatprep.subr.bf16.mxu0 %v770
    %954 = vmatpush1.bf16.msra.mxu0 %v769
    %955 = vmatprep.subr.bf16.mxu0 %v767
    %956 = vmatpush1.bf16.msra.mxu0 %v766
    %957 = vmatprep.subr.bf16.mxu0 %v764
    %958 = vmatpush1.bf16.msra.mxu0 %v763
    %959 = vmatprep.subr.bf16.mxu0 %v761
    %960 = vmatpush1.bf16.msra.mxu0 %v760
    %961 = vmatprep.subr.bf16.mxu0 %v806
    %962 = vmatpush2.bf16.msra.mxu0 %v805
    %963 = vmatprep.subr.bf16.mxu0 %v803
    %964 = vmatpush2.bf16.msra.mxu0 %v802
    %965 = vmatprep.subr.bf16.mxu0 %v800
    %966 = vmatpush2.bf16.msra.mxu0 %v799
    %967 = vmatprep.subr.bf16.mxu0 %v797
    %968 = vmatpush2.bf16.msra.mxu0 %v796
    %969 = vmatprep.subr.bf16.mxu0 %v794
    %970 = vmatpush2.bf16.msra.mxu0 %v793
    %971 = vmatprep.subr.bf16.mxu0 %v791
    %972 = vmatpush2.bf16.msra.mxu0 %v790
    %973 = vmatprep.subr.bf16.mxu0 %v788
    %974 = vmatpush2.bf16.msra.mxu0 %v787
    %975 = vmatprep.subr.bf16.mxu0 %v785
    %976 = vmatpush2.bf16.msra.mxu0 %v784
    %977 = vmatprep.mubr.bf16.mxu0 %v246
    %978 = vmatmul.mubr.bf16.gmra.mxu0 %v245
    %v979 = vpop.f32.mrf.mxu0
    %v980 = vadd.f32 %v939, %v979
    %v981 = vpop.f32.mrf.mxu0
    %v982 = vadd.f32 %v941, %v981
    %v983 = vpop.f32.mrf.mxu0
    %v984 = vpop.f32.mrf.mxu0
    %985 = vdwg.mxu0
    %986 = vmatprep.subr.bf16.mxu0 0
    %987 = vmatpush1.bf16.msra.mxu0 %v735
    %988 = vmatprep.subr.bf16.mxu0 0
    %989 = vmatpush1.bf16.msra.mxu0 %v732
    %990 = vmatprep.subr.bf16.mxu0 0
    %991 = vmatpush1.bf16.msra.mxu0 %v729
    %992 = vmatprep.subr.bf16.mxu0 0
    %993 = vmatpush1.bf16.msra.mxu0 %v726
    %994 = vmatprep.subr.bf16.mxu0 0
    %995 = vmatpush1.bf16.msra.mxu0 %v723
    %996 = vmatprep.subr.bf16.mxu0 0
    %997 = vmatpush1.bf16.msra.mxu0 %v720
    %998 = vmatprep.subr.bf16.mxu0 0
    %999 = vmatpush1.bf16.msra.mxu0 %v717
    %1000 = vmatprep.subr.bf16.mxu0 0
    %1001 = vmatpush1.bf16.msra.mxu0 %v714
    %1002 = vmatprep.subr.bf16.mxu0 0
    %1003 = vmatpush2.bf16.msra.mxu0 %v759
    %1004 = vmatprep.subr.bf16.mxu0 0
    %1005 = vmatpush2.bf16.msra.mxu0 %v756
    %1006 = vmatprep.subr.bf16.mxu0 0
    %1007 = vmatpush2.bf16.msra.mxu0 %v753
    %1008 = vmatprep.subr.bf16.mxu0 0
    %1009 = vmatpush2.bf16.msra.mxu0 %v750
    %1010 = vmatprep.subr.bf16.mxu0 0
    %1011 = vmatpush2.bf16.msra.mxu0 %v747
    %1012 = vmatprep.subr.bf16.mxu0 0
    %1013 = vmatpush2.bf16.msra.mxu0 %v744
    %1014 = vmatprep.subr.bf16.mxu0 0
    %1015 = vmatpush2.bf16.msra.mxu0 %v741
    %1016 = vmatprep.subr.bf16.mxu0 0
    %1017 = vmatpush2.bf16.msra.mxu0 %v738
    %1018 = vmatprep.mubr.bf16.mxu0 %v244
    %1019 = vmatmul.mubr.bf16.gmra.mxu0 %v243
    %v1020 = vpop.f32.mrf.mxu0
    %v1021 = vadd.f32 %v388, %v1020
    %v1022 = vpop.f32.mrf.mxu0
    %v1023 = vpop.f32.mrf.mxu0
    %v1024 = vpop.f32.mrf.mxu0
    %1025 = vdwg.mxu0
    %1026 = vmatprep.subr.bf16.mxu0 0
    %1027 = vmatpush1.bf16.msra.mxu0 %v783
    %1028 = vmatprep.subr.bf16.mxu0 0
    %1029 = vmatpush1.bf16.msra.mxu0 %v780
    %1030 = vmatprep.subr.bf16.mxu0 0
    %1031 = vmatpush1.bf16.msra.mxu0 %v777
    %1032 = vmatprep.subr.bf16.mxu0 0
    %1033 = vmatpush1.bf16.msra.mxu0 %v774
    %1034 = vmatprep.subr.bf16.mxu0 0
    %1035 = vmatpush1.bf16.msra.mxu0 %v771
    %1036 = vmatprep.subr.bf16.mxu0 0
    %1037 = vmatpush1.bf16.msra.mxu0 %v768
    %1038 = vmatprep.subr.bf16.mxu0 0
    %1039 = vmatpush1.bf16.msra.mxu0 %v765
    %1040 = vmatprep.subr.bf16.mxu0 0
    %1041 = vmatpush1.bf16.msra.mxu0 %v762
    %1042 = vmatprep.subr.bf16.mxu0 0
    %1043 = vmatpush2.bf16.msra.mxu0 %v807
    %1044 = vmatprep.subr.bf16.mxu0 0
    %1045 = vmatpush2.bf16.msra.mxu0 %v804
    %1046 = vmatprep.subr.bf16.mxu0 0
    %1047 = vmatpush2.bf16.msra.mxu0 %v801
    %1048 = vmatprep.subr.bf16.mxu0 0
    %1049 = vmatpush2.bf16.msra.mxu0 %v798
    %1050 = vmatprep.subr.bf16.mxu0 0
    %1051 = vmatpush2.bf16.msra.mxu0 %v795
    %1052 = vmatprep.subr.bf16.mxu0 0
    %1053 = vmatpush2.bf16.msra.mxu0 %v792
    %1054 = vmatprep.subr.bf16.mxu0 0
    %1055 = vmatpush2.bf16.msra.mxu0 %v789
    %1056 = vmatprep.subr.bf16.mxu0 0
    %1057 = vmatpush2.bf16.msra.mxu0 %v786
    %1058 = vmatprep.mubr.bf16.mxu0 %v246
    %1059 = vmatmul.mubr.bf16.gmra.mxu0 %v245
    %v1060 = vpop.f32.mrf.mxu0
    %v1061 = vadd.f32 %v1021, %v1060
    %v1062 = vpop.f32.mrf.mxu0
    %v1063 = vpop.f32.mrf.mxu0
    %v1064 = vpop.f32.mrf.mxu0
    %1065 = vdwg.mxu0
    %v1066 = vmax.f32 %v980, 0.0
    %v1067 = vmax.f32 %v982, 0.0
    %v1068 = vmax.f32 %v1061, 0.0
    %v1069 = vld [vmem:[%s5] sm:$0x7]
    %v1071 = vlaneseq
    %v1072 = vshrl.u32 %v1071, 7
    %v1073 = vsub.s32 0, %v1072
    %v1074 = vrot.slane %v1069, %v1073
    %v1075 = vlaneseq
    %v1076 = vshrl.u32 %v1075, 7
    %v1077 = vsub.s32 1, %v1076
    %v1078 = vrot.slane %v1069, %v1077
    %v1079 = vlaneseq
    %v1080 = vshrl.u32 %v1079, 7
    %v1081 = vsub.s32 2, %v1080
    %v1082 = vrot.slane %v1069, %v1081
    %v1086 = vmul.f32 %v1066, %v1074
    %v1087 = vmul.f32 %v1067, %v1078
    %v1088 = vmul.f32 %v1068, %v1082
    %v1089 = vadd.f32 %v1086, %v1087
    %v1090 = vadd.f32 %v1089, %v1088
    %1091 = vadd.xlane.f32.xlu0 %v1090
    %v1092 = vpop.xlane.xlu0 %1091
    %v1093 = vld [vmem:[#allocation2] sm:$0x1]
    %v1095 = vlaneseq
    %v1096 = vshrl.u32 %v1095, 7
    %v1097 = vsub.s32 0, %v1096
    %v1098 = vrot.slane %v1093, %v1097
    %v1100 = vadd.f32 %v1092, %v1098
    %vm1101 = vcmask 7168
    %1102 = vst.msk [vmem:[%s7] sm:$0xff] %vm1101, %v1100
    // Predicated region
    $region42: #{tpu_custom_call.1} parent=1 // pred_check
      _
    $region43: #{tpu_custom_call.1} parent=1 // pred_check_branch
      %1104 = sbr.rel (0) target = $region45
    $region44: #{tpu_custom_call.1} parent=1 // pred_region
      _
    $region45: #{tpu_custom_call.1} parent=1 // pred_fallthru
      _
    // Predicated region
    $region46: #{tpu_custom_call.1} parent=1 // pred_check
      _
    $region47: #{tpu_custom_call.1} parent=1 // pred_check_branch
      %1106 = sbr.rel (0) target = $region49
    $region48: #{tpu_custom_call.1} parent=1 // pred_region
      _
    $region49: #{tpu_custom_call.1} parent=1 // pred_fallthru
      _
    %1107 = vsyncpa [#allocation4], 1
    %1108 = vsyncpa [#allocation6], 1

</llo_original>
